<compile_context>
chip_gen: v7x
topology: tpu7x:2x2x1
jax: 0.10.0
libtpu: 0.0.40
codegen_flags: <defaults>
</compile_context>

<pallas_src>
import functools

import jax
import jax.numpy as jnp
from jax.experimental import pallas as pl
from jax.experimental.pallas import tpu as pltpu


def mlp_kernel(x_ref, w1_ref, b1_ref, w2_ref, b2_ref, w3_ref, b3_ref, o_ref):
    # x_ref: (in_in, blk)  -- batch on the lane axis.
    # Weights are PyTorch-layout (out, in); biases are (out, 1) f32.
    x = x_ref[...]
    h1 = jnp.dot(w1_ref[...], x, preferred_element_type=jnp.float32) + b1_ref[...]
    h1 = jnp.maximum(h1, 0.0)                                   # (n1, blk) f32
    h2 = jnp.dot(w2_ref[...], h1.astype(w2_ref.dtype),
                 preferred_element_type=jnp.float32) + b2_ref[...]
    h2 = jnp.maximum(h2, 0.0)                                   # (n2, blk) f32
    out = jnp.dot(w3_ref[...], h2.astype(w3_ref.dtype),
                  preferred_element_type=jnp.float32) + b3_ref[...]
    o_ref[...] = out.astype(o_ref.dtype)                        # lane-dense store


@functools.partial(jax.jit, static_argnames=("block_b", "compute_dtype"))
def alpha_mcf_forward(x, params, block_b=512, compute_dtype=jnp.float32):
    """x: [B, in_in] float32.  params: PyTorch-layout weights (out, in), biases (out,)."""
    assert block_b % 128 == 0, "block_b must be a multiple of 128 (lane width)"
    w1, b1 = params["w1"], params["b1"]   # (n1, in_in), (n1,)
    w2, b2 = params["w2"], params["b2"]   # (n2, n1),    (n2,)
    w3, b3 = params["w3"], params["b3"]   # (out, n2),   (out,)

    B, in_in = x.shape
    n1, n2, out_out = w1.shape[0], w2.shape[0], w3.shape[0]

    # Batch tile: cap at the 128-padded batch so small B runs as a single tile,
    # pad the remainder with zeros (sliced off at the end) instead of asserting.
    blk = min(block_b, pl.cdiv(B, 128) * 128)
    b_pad = pl.cdiv(B, blk) * blk

    x_t = x.T                                      # (in_in, B) feature-major
    if b_pad != B:
        x_t = jnp.pad(x_t, ((0, 0), (0, b_pad - B)))
    x_t = x_t.astype(compute_dtype)

    w1c = w1.astype(compute_dtype)
    w2c = w2.astype(compute_dtype)
    w3c = w3.astype(compute_dtype)
    b1c = b1.reshape(n1, 1).astype(jnp.float32)
    b2c = b2.reshape(n2, 1).astype(jnp.float32)
    b3c = b3.reshape(out_out, 1).astype(jnp.float32)

    grid = (b_pad // blk,)
    in_bytes = jnp.dtype(compute_dtype).itemsize
    cost = pl.CostEstimate(
        flops=2 * b_pad * (in_in * n1 + n1 * n2 + n2 * out_out),
        transcendentals=0,
        bytes_accessed=(b_pad * in_in * in_bytes                       # x
                        + (n1 * in_in + n2 * n1 + out_out * n2) * in_bytes  # weights
                        + (n1 + n2 + out_out) * 4                      # biases
                        + b_pad * out_out * x.dtype.itemsize),         # output
    )

    out_t = pl.pallas_call(
        mlp_kernel,
        out_shape=jax.ShapeDtypeStruct((out_out, b_pad), x.dtype),
        grid_spec=pltpu.PrefetchScalarGridSpec(
            num_scalar_prefetch=0,
            grid=grid,
            in_specs=[
                pl.BlockSpec((in_in, blk), lambda i: (0, i)),     # x tile (batch on lanes)
                pl.BlockSpec((n1, in_in), lambda i: (0, 0)),      # w1 (full, resident)
                pl.BlockSpec((n1, 1), lambda i: (0, 0)),          # b1
                pl.BlockSpec((n2, n1), lambda i: (0, 0)),         # w2
                pl.BlockSpec((n2, 1), lambda i: (0, 0)),          # b2
                pl.BlockSpec((out_out, n2), lambda i: (0, 0)),    # w3
                pl.BlockSpec((out_out, 1), lambda i: (0, 0)),     # b3
            ],
            out_specs=pl.BlockSpec((out_out, blk), lambda i: (0, i)),
        ),
        compiler_params=pltpu.CompilerParams(
            dimension_semantics=("parallel",),   # batch tiles shard across TCs (v7x)
        ),
        cost_estimate=cost,
    )(x_t, w1c, b1c, w2c, b2c, w3c, b3c)

    return out_t[:, :B].T                          # back to (B, out_out)


def init_params(key, in_in, out_out, n1, n2):
    """nn.Linear-style init U(-1/sqrt(fan_in), 1/sqrt(fan_in)); PyTorch (out, in) layout."""
    def linear(k, fan_in, fan_out):
        kw, kb = jax.random.split(k)
        bound = 1.0 / jnp.sqrt(float(fan_in))
        w = jax.random.uniform(kw, (fan_out, fan_in), jnp.float32, -bound, bound)
        b = jax.random.uniform(kb, (fan_out,), jnp.float32, -bound, bound)
        return w, b

    k1, k2, k3 = jax.random.split(key, 3)
    w1, b1 = linear(k1, in_in, n1)
    w2, b2 = linear(k2, n1, n2)
    w3, b3 = linear(k3, n2, out_out)
    return {"w1": w1, "b1": b1, "w2": w2, "b2": b2, "w3": w3, "b3": b3}


def reference_forward(x, p):
    h1 = jnp.maximum(x @ p["w1"].T + p["b1"], 0.0)
    h2 = jnp.maximum(h1 @ p["w2"].T + p["b2"], 0.0)
    return h2 @ p["w3"].T + p["b3"]


if __name__ == "__main__":
    # Shapes consistent with AlphaMCFModel(in_in, out_out, n1, n2)
    B, in_in, out_out, n1, n2 = 16, 32, 8, 64, 32

    key = jax.random.PRNGKey(0)
    kx, kp, kx2 = jax.random.split(key, 3)
    x = jax.random.normal(kx, (B, in_in), jnp.float32)
    params = init_params(kp, in_in, out_out, n1, n2)

    # 1) Small batch, f32 path (single grid step; batch zero-padded to 128 lanes).
    out = jax.block_until_ready(alpha_mcf_forward(x, params))
    ref = reference_forward(x, params)
    assert out.shape == (B, out_out)
    assert jnp.allclose(out, ref, atol=1e-5, rtol=1e-5), "f32 mismatch vs reference"

    # 2) Larger ragged batch, bf16 compute path (multi-tile grid + padding path).
    B2 = 1000
    x2 = jax.random.normal(kx2, (B2, in_in), jnp.float32)
    out2 = jax.block_until_ready(
        alpha_mcf_forward(x2, params, block_b=512, compute_dtype=jnp.bfloat16))
    ref2 = reference_forward(x2, params)
    assert out2.shape == (B2, out_out)
    assert jnp.allclose(out2, ref2, atol=5e-2, rtol=5e-2), "bf16 mismatch vs reference"

    print("KERNEL_OK")
</pallas_src>

<mosaic_0001>
module attributes {stable_mosaic.version = 11 : i64} {
  func.func @mlp_kernel(%arg0: i32, %arg1: memref<32x128xf32, #tpu.memory_space<vmem>>, %arg2: memref<64x32xf32, #tpu.memory_space<vmem>>, %arg3: memref<64x1xf32, #tpu.memory_space<vmem>>, %arg4: memref<32x64xf32, #tpu.memory_space<vmem>>, %arg5: memref<32x1xf32, #tpu.memory_space<vmem>>, %arg6: memref<8x32xf32, #tpu.memory_space<vmem>>, %arg7: memref<8x1xf32, #tpu.memory_space<vmem>>, %arg8: memref<8x128xf32, #tpu.memory_space<vmem>>) attributes {dimension_semantics = [#tpu.dimension_semantics<parallel>], iteration_bounds = array<i64: 1>, scalar_prefetch = 0 : i64, scratch_operands = 0 : i64, tpu.core_type = #tpu.core_type<tc>, window_params = [{transform_indices = @transform_0, window_bounds = array<i64: 32, 128>}, {pipeline_mode = #tpu.pipeline_mode<synchronous>, transform_indices = @transform_1, window_bounds = array<i64: 64, 32>}, {pipeline_mode = #tpu.pipeline_mode<synchronous>, transform_indices = @transform_2, window_bounds = array<i64: 64, 1>}, {pipeline_mode = #tpu.pipeline_mode<synchronous>, transform_indices = @transform_3, window_bounds = array<i64: 32, 64>}, {pipeline_mode = #tpu.pipeline_mode<synchronous>, transform_indices = @transform_4, window_bounds = array<i64: 32, 1>}, {pipeline_mode = #tpu.pipeline_mode<synchronous>, transform_indices = @transform_5, window_bounds = array<i64: 8, 32>}, {pipeline_mode = #tpu.pipeline_mode<synchronous>, transform_indices = @transform_6, window_bounds = array<i64: 8, 1>}, {transform_indices = @transform_7, window_bounds = array<i64: 8, 128>}]} {
    %c0 = arith.constant 0 : index
    %c0_0 = arith.constant 0 : index
    %0 = vector.load %arg1[%c0, %c0_0] : memref<32x128xf32, #tpu.memory_space<vmem>>, vector<32x128xf32>
    %c0_1 = arith.constant 0 : index
    %c0_2 = arith.constant 0 : index
    %1 = vector.load %arg2[%c0_1, %c0_2] : memref<64x32xf32, #tpu.memory_space<vmem>>, vector<64x32xf32>
    %cst = arith.constant dense<0.000000e+00> : vector<64x128xf32>
    %2 = tpu.matmul %1, %0, %cst {dimension_numbers = #tpu.dot_dimension_numbers<[1], [0], [0], [1], [0, 0, 1, 1], [], []>} : vector<64x32xf32>, vector<32x128xf32>, vector<64x128xf32> -> vector<64x128xf32>
    %c0_3 = arith.constant 0 : index
    %c0_4 = arith.constant 0 : index
    %3 = vector.load %arg3[%c0_3, %c0_4] : memref<64x1xf32, #tpu.memory_space<vmem>>, vector<64x1xf32>
    %4 = vector.broadcast %3 : vector<64x1xf32> to vector<64x128xf32>
    %5 = arith.addf %2, %4 : vector<64x128xf32>
    %cst_5 = arith.constant 0.000000e+00 : f32
    %6 = vector.broadcast %cst_5 : f32 to vector<64x128xf32>
    %7 = arith.maximumf %5, %6 : vector<64x128xf32>
    %c0_6 = arith.constant 0 : index
    %c0_7 = arith.constant 0 : index
    %8 = vector.load %arg4[%c0_6, %c0_7] : memref<32x64xf32, #tpu.memory_space<vmem>>, vector<32x64xf32>
    %cst_8 = arith.constant dense<0.000000e+00> : vector<32x128xf32>
    %9 = tpu.matmul %8, %7, %cst_8 {dimension_numbers = #tpu.dot_dimension_numbers<[1], [0], [0], [1], [0, 0, 1, 1], [], []>} : vector<32x64xf32>, vector<64x128xf32>, vector<32x128xf32> -> vector<32x128xf32>
    %c0_9 = arith.constant 0 : index
    %c0_10 = arith.constant 0 : index
    %10 = vector.load %arg5[%c0_9, %c0_10] : memref<32x1xf32, #tpu.memory_space<vmem>>, vector<32x1xf32>
    %11 = vector.broadcast %10 : vector<32x1xf32> to vector<32x128xf32>
    %12 = arith.addf %9, %11 : vector<32x128xf32>
    %cst_11 = arith.constant 0.000000e+00 : f32
    %13 = vector.broadcast %cst_11 : f32 to vector<32x128xf32>
    %14 = arith.maximumf %12, %13 : vector<32x128xf32>
    %c0_12 = arith.constant 0 : index
    %c0_13 = arith.constant 0 : index
    %15 = vector.load %arg6[%c0_12, %c0_13] : memref<8x32xf32, #tpu.memory_space<vmem>>, vector<8x32xf32>
    %cst_14 = arith.constant dense<0.000000e+00> : vector<8x128xf32>
    %16 = tpu.matmul %15, %14, %cst_14 {dimension_numbers = #tpu.dot_dimension_numbers<[1], [0], [0], [1], [0, 0, 1, 1], [], []>} : vector<8x32xf32>, vector<32x128xf32>, vector<8x128xf32> -> vector<8x128xf32>
    %c0_15 = arith.constant 0 : index
    %c0_16 = arith.constant 0 : index
    %17 = vector.load %arg7[%c0_15, %c0_16] : memref<8x1xf32, #tpu.memory_space<vmem>>, vector<8x1xf32>
    %18 = vector.broadcast %17 : vector<8x1xf32> to vector<8x128xf32>
    %19 = arith.addf %16, %18 : vector<8x128xf32>
    %c0_17 = arith.constant 0 : index
    %c0_18 = arith.constant 0 : index
    %20 = vector.load %arg8[%c0_17, %c0_18] : memref<8x128xf32, #tpu.memory_space<vmem>>, vector<8x128xf32>
    tpu.vector_store %arg8[%c0_17, %c0_18], %19 {strides = array<i32>} : memref<8x128xf32, #tpu.memory_space<vmem>>, vector<8x128xf32>,
    return
  }
  func.func @transform_0(%arg0: i32) -> (i32, i32) {
    %c0_i32 = arith.constant 0 : i32
    %c0_i32_0 = arith.constant 0 : i32
    return %c0_i32, %arg0 : i32, i32
  }
  func.func @transform_1(%arg0: i32) -> (i32, i32) {
    %c0_i32 = arith.constant 0 : i32
    %c0_i32_0 = arith.constant 0 : i32
    %c0_i32_1 = arith.constant 0 : i32
    return %c0_i32, %c0_i32_0 : i32, i32
  }
  func.func @transform_2(%arg0: i32) -> (i32, i32) {
    %c0_i32 = arith.constant 0 : i32
    %c0_i32_0 = arith.constant 0 : i32
    %c0_i32_1 = arith.constant 0 : i32
    return %c0_i32, %c0_i32_0 : i32, i32
  }
  func.func @transform_3(%arg0: i32) -> (i32, i32) {
    %c0_i32 = arith.constant 0 : i32
    %c0_i32_0 = arith.constant 0 : i32
    %c0_i32_1 = arith.constant 0 : i32
    return %c0_i32, %c0_i32_0 : i32, i32
  }
  func.func @transform_4(%arg0: i32) -> (i32, i32) {
    %c0_i32 = arith.constant 0 : i32
    %c0_i32_0 = arith.constant 0 : i32
    %c0_i32_1 = arith.constant 0 : i32
    return %c0_i32, %c0_i32_0 : i32, i32
  }
  func.func @transform_5(%arg0: i32) -> (i32, i32) {
    %c0_i32 = arith.constant 0 : i32
    %c0_i32_0 = arith.constant 0 : i32
    %c0_i32_1 = arith.constant 0 : i32
    return %c0_i32, %c0_i32_0 : i32, i32
  }
  func.func @transform_6(%arg0: i32) -> (i32, i32) {
    %c0_i32 = arith.constant 0 : i32
    %c0_i32_0 = arith.constant 0 : i32
    %c0_i32_1 = arith.constant 0 : i32
    return %c0_i32, %c0_i32_0 : i32, i32
  }
  func.func @transform_7(%arg0: i32) -> (i32, i32) {
    %c0_i32 = arith.constant 0 : i32
    %c0_i32_0 = arith.constant 0 : i32
    return %c0_i32, %arg0 : i32, i32
  }
}

</mosaic_0001>

<llo_original>
// kernel: alpha_mcf_forward.1
$region0: #{alpha_mcf_forward.1}
  #allocation0 [shape = 'u32[]', space=smem, size = 0x4, offset = 0x4, fixed_abs, tag = 'smem constant byte address 0x4 - core index']
  #allocation1 [shape = 'u32[144,128]{1,0:T(1,128)}', space=vmem, size = 0x12000, scoped, tag = 'internal scratch']
  %s0 = inlined_call_operand.vmem [shape: f32[32,128], index: 0, kind: input, shape index: {}]
  %s1 = inlined_call_operand.vmem [shape: f32[64,32], index: 1, kind: input, shape index: {}]
  %s2 = inlined_call_operand.vmem [shape: f32[64,1], index: 2, kind: input, shape index: {}]
  %s3 = inlined_call_operand.vmem [shape: f32[32,64], index: 3, kind: input, shape index: {}]
  %s4 = inlined_call_operand.vmem [shape: f32[32,1], index: 4, kind: input, shape index: {}]
  %s5 = inlined_call_operand.vmem [shape: f32[8,32], index: 5, kind: input, shape index: {}]
  %s6 = inlined_call_operand.vmem [shape: f32[8,1], index: 6, kind: input, shape index: {}]
  %s7 = inlined_call_operand.vmem [shape: f32[8,128], index: 7, kind: output, shape index: {}]
  %s8 = sld [smem:[#allocation0]]
  $region38: #{alpha_mcf_forward.1} parent=0
    _
  %s10 = ssub.s32 1, %s8
  %s11 = scalar_select 0, %s10, %s8
  // Predicated region
  $region2: #{alpha_mcf_forward.1} parent=0 // pred_check
    _
  $region3: #{alpha_mcf_forward.1} parent=0 // pred_check_branch
    %13 = sbr.rel (0) target = $region5
  $region4: #{alpha_mcf_forward.1} parent=0 // pred_region
    _
  $region5: #{alpha_mcf_forward.1} parent=0 // pred_fallthru
    _
  // Predicated region
  $region6: #{alpha_mcf_forward.1} parent=0 // pred_check
    _
  $region7: #{alpha_mcf_forward.1} parent=0 // pred_check_branch
    %15 = sbr.rel (0) target = $region9
  $region8: #{alpha_mcf_forward.1} parent=0 // pred_region
    _
  $region9: #{alpha_mcf_forward.1} parent=0 // pred_fallthru
    _
  // Predicated region
  $region10: #{alpha_mcf_forward.1} parent=0 // pred_check
    _
  $region11: #{alpha_mcf_forward.1} parent=0 // pred_check_branch
    %17 = sbr.rel (0) target = $region13
  $region12: #{alpha_mcf_forward.1} parent=0 // pred_region
    _
  $region13: #{alpha_mcf_forward.1} parent=0 // pred_fallthru
    _
  // Predicated region
  $region14: #{alpha_mcf_forward.1} parent=0 // pred_check
    _
  $region15: #{alpha_mcf_forward.1} parent=0 // pred_check_branch
    %19 = sbr.rel (0) target = $region17
  $region16: #{alpha_mcf_forward.1} parent=0 // pred_region
    _
  $region17: #{alpha_mcf_forward.1} parent=0 // pred_fallthru
    _
  // Predicated region
  $region18: #{alpha_mcf_forward.1} parent=0 // pred_check
    _
  $region19: #{alpha_mcf_forward.1} parent=0 // pred_check_branch
    %21 = sbr.rel (0) target = $region21
  $region20: #{alpha_mcf_forward.1} parent=0 // pred_region
    _
  $region21: #{alpha_mcf_forward.1} parent=0 // pred_fallthru
    _
  // Predicated region
  $region22: #{alpha_mcf_forward.1} parent=0 // pred_check
    _
  $region23: #{alpha_mcf_forward.1} parent=0 // pred_check_branch
    %23 = sbr.rel (0) target = $region25
  $region24: #{alpha_mcf_forward.1} parent=0 // pred_region
    _
  $region25: #{alpha_mcf_forward.1} parent=0 // pred_fallthru
    _
  // Predicated region
  $region26: #{alpha_mcf_forward.1} parent=0 // pred_check
    _
  $region27: #{alpha_mcf_forward.1} parent=0 // pred_check_branch
    %25 = sbr.rel (0) target = $region29
  $region28: #{alpha_mcf_forward.1} parent=0 // pred_region
    _
  $region29: #{alpha_mcf_forward.1} parent=0 // pred_fallthru
    _
  %v26 = vld [vmem:[%s0] sm:$0xff]
  %v27 = vld [vmem:[%s0 + $0x8] sm:$0xff]
  %v28 = vld [vmem:[%s0 + $0x10] sm:$0xff]
  %v29 = vld [vmem:[%s0 + $0x18] sm:$0xff]
  %v30 = vld [vmem:[%s1] sm:$0xff]
  %v31 = vld [vmem:[%s1 + $0x8] sm:$0xff]
  %v32 = vld [vmem:[%s1 + $0x10] sm:$0xff]
  %v33 = vld [vmem:[%s1 + $0x18] sm:$0xff]
  %v34 = vld [vmem:[%s1 + $0x20] sm:$0xff]
  %v35 = vld [vmem:[%s1 + $0x28] sm:$0xff]
  %v36 = vld [vmem:[%s1 + $0x30] sm:$0xff]
  %v37 = vld [vmem:[%s1 + $0x38] sm:$0xff]
  %v38 = vld [vmem:[%s2] sm:$0xff]
  %v39 = vld [vmem:[%s2 + $0x8] sm:$0xff]
  %v40 = vld [vmem:[%s2 + $0x10] sm:$0xff]
  %v41 = vld [vmem:[%s2 + $0x18] sm:$0xff]
  %v42 = vld [vmem:[%s2 + $0x20] sm:$0xff]
  %v43 = vld [vmem:[%s2 + $0x28] sm:$0xff]
  %v44 = vld [vmem:[%s2 + $0x30] sm:$0xff]
  %v45 = vld [vmem:[%s2 + $0x38] sm:$0xff]
  %47 = vset.pattern.permute.xlu0 0
  %48 = vperm.xlu0 %47, %v38
  %v49 = vpop.permute.xlu0 %48
  %52 = vset.pattern.permute.xlu0 0
  %53 = vperm.xlu0 %52, %v39
  %v54 = vpop.permute.xlu0 %53
  %57 = vset.pattern.permute.xlu0 0
  %58 = vperm.xlu0 %57, %v40
  %v59 = vpop.permute.xlu0 %58
  %62 = vset.pattern.permute.xlu0 0
  %63 = vperm.xlu0 %62, %v41
  %v64 = vpop.permute.xlu0 %63
  %67 = vset.pattern.permute.xlu0 0
  %68 = vperm.xlu0 %67, %v42
  %v69 = vpop.permute.xlu0 %68
  %72 = vset.pattern.permute.xlu0 0
  %73 = vperm.xlu0 %72, %v43
  %v74 = vpop.permute.xlu0 %73
  %77 = vset.pattern.permute.xlu0 0
  %78 = vperm.xlu0 %77, %v44
  %v79 = vpop.permute.xlu0 %78
  %82 = vset.pattern.permute.xlu0 0
  %83 = vperm.xlu0 %82, %v45
  %v84 = vpop.permute.xlu0 %83
  %vm86 = vcmask 261120
  %v88 = vsel %vm86, %v30, 0
  %v91 = vsel %vm86, %v31, 0
  %v94 = vsel %vm86, %v32, 0
  %v97 = vsel %vm86, %v33, 0
  %v100 = vsel %vm86, %v34, 0
  %v103 = vsel %vm86, %v35, 0
  %v106 = vsel %vm86, %v36, 0
  %v109 = vsel %vm86, %v37, 0
  %111 = vmatprep.subr.mxu0 0.0
  %112 = vmatpush1.msra.mxu0 %v26
  %113 = vmatprep.subr.mxu0 0.0
  %114 = vmatpush1.msra.mxu0 %v27
  %115 = vmatprep.subr.mxu0 0.0
  %116 = vmatpush1.msra.mxu0 %v28
  %117 = vmatprep.subr.mxu0 0.0
  %118 = vmatpush1.msra.mxu0 %v29
  %119 = vmatprep.subr.mxu0 0.0
  %120 = vmatpush1.msra.mxu0 0.0
  %121 = vmatprep.subr.mxu0 0.0
  %122 = vmatpush1.msra.mxu0 0.0
  %123 = vmatprep.subr.mxu0 0.0
  %124 = vmatpush1.msra.mxu0 0.0
  %125 = vmatprep.subr.mxu0 0.0
  %126 = vmatpush1.msra.mxu0 0.0
  %127 = vmatprep.subr.mxu0 0.0
  %128 = vmatpush1.msra.mxu0 0.0
  %129 = vmatprep.subr.mxu0 0.0
  %130 = vmatpush1.msra.mxu0 0.0
  %131 = vmatprep.subr.mxu0 0.0
  %132 = vmatpush1.msra.mxu0 0.0
  %133 = vmatprep.subr.mxu0 0.0
  %134 = vmatpush1.msra.mxu0 0.0
  %135 = vmatprep.subr.mxu0 0.0
  %136 = vmatpush1.msra.mxu0 0.0
  %137 = vmatprep.subr.mxu0 0.0
  %138 = vmatpush1.msra.mxu0 0.0
  %139 = vmatprep.subr.mxu0 0.0
  %140 = vmatpush1.msra.mxu0 0.0
  %141 = vmatprep.subr.mxu0 0.0
  %142 = vmatpush1.msra.mxu0 0.0
  %143 = vmatprep.subr.mxu0 0.0
  %144 = vmatpush1.msra.mxu0 0.0
  %145 = vmatprep.subr.mxu0 0.0
  %146 = vmatpush1.msra.mxu0 0.0
  %147 = vmatprep.subr.mxu0 0.0
  %148 = vmatpush1.msra.mxu0 0.0
  %149 = vmatprep.subr.mxu0 0.0
  %150 = vmatpush1.msra.mxu0 0.0
  %151 = vmatprep.subr.mxu0 0.0
  %152 = vmatpush1.msra.mxu0 0.0
  %153 = vmatprep.subr.mxu0 0.0
  %154 = vmatpush1.msra.mxu0 0.0
  %155 = vmatprep.subr.mxu0 0.0
  %156 = vmatpush1.msra.mxu0 0.0
  %157 = vmatprep.subr.mxu0 0.0
  %158 = vmatpush1.msra.mxu0 0.0
  %159 = vmatprep.subr.mxu0 0.0
  %160 = vmatpush1.msra.mxu0 0.0
  %161 = vmatprep.subr.mxu0 0.0
  %162 = vmatpush1.msra.mxu0 0.0
  %163 = vmatprep.subr.mxu0 0.0
  %164 = vmatpush1.msra.mxu0 0.0
  %165 = vmatprep.subr.mxu0 0.0
  %166 = vmatpush1.msra.mxu0 0.0
  %167 = vmatprep.subr.mxu0 0.0
  %168 = vmatpush1.msra.mxu0 0.0
  %169 = vmatprep.subr.mxu0 0.0
  %170 = vmatpush1.msra.mxu0 0.0
  %171 = vmatprep.subr.mxu0 0.0
  %172 = vmatpush1.msra.mxu0 0.0
  %173 = vmatprep.subr.mxu0 0.0
  %174 = vmatpush1.msra.mxu0 0.0
  %175 = vmatprep.mubr.f32.mxu0 0.0
  %176 = vmatmul.mubr.f32.gmra.mrb[0].mxu0 %v88
  %v177 = vpop.f32.mrb[0].mxu0
  %v178 = vadd.f32 %v49, %v177
  %v179 = vpop.f32.mrb[0].mxu0
  %180 = vmatprep.mubr.f32.mxu0 0.0
  %181 = vmatmul.mubr.f32.gmra.mrb[0].mxu0 %v91
  %v182 = vpop.f32.mrb[0].mxu0
  %v183 = vadd.f32 %v54, %v182
  %v184 = vpop.f32.mrb[0].mxu0
  %185 = vmatprep.mubr.f32.mxu0 0.0
  %186 = vmatmul.mubr.f32.gmra.mrb[0].mxu0 %v94
  %v187 = vpop.f32.mrb[0].mxu0
  %v188 = vadd.f32 %v59, %v187
  %v189 = vpop.f32.mrb[0].mxu0
  %190 = vmatprep.mubr.f32.mxu0 0.0
  %191 = vmatmul.mubr.f32.gmra.mrb[0].mxu0 %v97
  %v192 = vpop.f32.mrb[0].mxu0
  %v193 = vadd.f32 %v64, %v192
  %v194 = vpop.f32.mrb[0].mxu0
  %195 = vmatprep.mubr.f32.mxu0 0.0
  %196 = vmatmul.mubr.f32.gmra.mrb[0].mxu0 %v100
  %v197 = vpop.f32.mrb[0].mxu0
  %v198 = vadd.f32 %v69, %v197
  %v199 = vpop.f32.mrb[0].mxu0
  %200 = vmatprep.mubr.f32.mxu0 0.0
  %201 = vmatmul.mubr.f32.gmra.mrb[0].mxu0 %v103
  %v202 = vpop.f32.mrb[0].mxu0
  %v203 = vadd.f32 %v74, %v202
  %v204 = vpop.f32.mrb[0].mxu0
  %205 = vmatprep.mubr.f32.mxu0 0.0
  %206 = vmatmul.mubr.f32.gmra.mrb[0].mxu0 %v106
  %v207 = vpop.f32.mrb[0].mxu0
  %v208 = vadd.f32 %v79, %v207
  %v209 = vpop.f32.mrb[0].mxu0
  %210 = vmatprep.mubr.f32.mxu0 0.0
  %211 = vmatmul.mubr.f32.gmra.mrb[0].mxu0 %v109
  %v212 = vpop.f32.mrb[0].mxu0
  %v213 = vadd.f32 %v84, %v212
  %v214 = vpop.f32.mrb[0].mxu0
  %215 = vdwg.mxu0
  %v216 = vmax.f32 %v178, 0.0
  %v217 = vmax.f32 %v183, 0.0
  %v218 = vmax.f32 %v188, 0.0
  %v219 = vmax.f32 %v193, 0.0
  %v220 = vmax.f32 %v198, 0.0
  %v221 = vmax.f32 %v203, 0.0
  %v222 = vmax.f32 %v208, 0.0
  %v223 = vmax.f32 %v213, 0.0
  %v224 = vld [vmem:[%s3] sm:$0xff]
  %v225 = vld [vmem:[%s3 + $0x8] sm:$0xff]
  %v226 = vld [vmem:[%s3 + $0x10] sm:$0xff]
  %v227 = vld [vmem:[%s3 + $0x18] sm:$0xff]
  %v228 = vld [vmem:[%s4] sm:$0xff]
  %v229 = vld [vmem:[%s4 + $0x8] sm:$0xff]
  %v230 = vld [vmem:[%s4 + $0x10] sm:$0xff]
  %v231 = vld [vmem:[%s4 + $0x18] sm:$0xff]
  %233 = vset.pattern.permute.xlu0 0
  %234 = vperm.xlu0 %233, %v228
  %v235 = vpop.permute.xlu0 %234
  %238 = vset.pattern.permute.xlu0 0
  %239 = vperm.xlu0 %238, %v229
  %v240 = vpop.permute.xlu0 %239
  %243 = vset.pattern.permute.xlu0 0
  %244 = vperm.xlu0 %243, %v230
  %v245 = vpop.permute.xlu0 %244
  %248 = vset.pattern.permute.xlu0 0
  %249 = vperm.xlu0 %248, %v231
  %v250 = vpop.permute.xlu0 %249
  %vm252 = vcmask 523264
  %v254 = vsel %vm252, %v224, 0
  %v257 = vsel %vm252, %v225, 0
  %v260 = vsel %vm252, %v226, 0
  %v263 = vsel %vm252, %v227, 0
  %265 = vmatprep.subr.mxu0 0.0
  %266 = vmatpush1.msra.mxu0 %v216
  %267 = vmatprep.subr.mxu0 0.0
  %268 = vmatpush1.msra.mxu0 %v217
  %269 = vmatprep.subr.mxu0 0.0
  %270 = vmatpush1.msra.mxu0 %v218
  %271 = vmatprep.subr.mxu0 0.0
  %272 = vmatpush1.msra.mxu0 %v219
  %273 = vmatprep.subr.mxu0 0.0
  %274 = vmatpush1.msra.mxu0 %v220
  %275 = vmatprep.subr.mxu0 0.0
  %276 = vmatpush1.msra.mxu0 %v221
  %277 = vmatprep.subr.mxu0 0.0
  %278 = vmatpush1.msra.mxu0 %v222
  %279 = vmatprep.subr.mxu0 0.0
  %280 = vmatpush1.msra.mxu0 %v223
  %281 = vmatprep.subr.mxu0 0.0
  %282 = vmatpush1.msra.mxu0 0.0
  %283 = vmatprep.subr.mxu0 0.0
  %284 = vmatpush1.msra.mxu0 0.0
  %285 = vmatprep.subr.mxu0 0.0
  %286 = vmatpush1.msra.mxu0 0.0
  %287 = vmatprep.subr.mxu0 0.0
  %288 = vmatpush1.msra.mxu0 0.0
  %289 = vmatprep.subr.mxu0 0.0
  %290 = vmatpush1.msra.mxu0 0.0
  %291 = vmatprep.subr.mxu0 0.0
  %292 = vmatpush1.msra.mxu0 0.0
  %293 = vmatprep.subr.mxu0 0.0
  %294 = vmatpush1.msra.mxu0 0.0
  %295 = vmatprep.subr.mxu0 0.0
  %296 = vmatpush1.msra.mxu0 0.0
  %297 = vmatprep.subr.mxu0 0.0
  %298 = vmatpush1.msra.mxu0 0.0
  %299 = vmatprep.subr.mxu0 0.0
  %300 = vmatpush1.msra.mxu0 0.0
  %301 = vmatprep.subr.mxu0 0.0
  %302 = vmatpush1.msra.mxu0 0.0
  %303 = vmatprep.subr.mxu0 0.0
  %304 = vmatpush1.msra.mxu0 0.0
  %305 = vmatprep.subr.mxu0 0.0
  %306 = vmatpush1.msra.mxu0 0.0
  %307 = vmatprep.subr.mxu0 0.0
  %308 = vmatpush1.msra.mxu0 0.0
  %309 = vmatprep.subr.mxu0 0.0
  %310 = vmatpush1.msra.mxu0 0.0
  %311 = vmatprep.subr.mxu0 0.0
  %312 = vmatpush1.msra.mxu0 0.0
  %313 = vmatprep.subr.mxu0 0.0
  %314 = vmatpush1.msra.mxu0 0.0
  %315 = vmatprep.subr.mxu0 0.0
  %316 = vmatpush1.msra.mxu0 0.0
  %317 = vmatprep.subr.mxu0 0.0
  %318 = vmatpush1.msra.mxu0 0.0
  %319 = vmatprep.subr.mxu0 0.0
  %320 = vmatpush1.msra.mxu0 0.0
  %321 = vmatprep.subr.mxu0 0.0
  %322 = vmatpush1.msra.mxu0 0.0
  %323 = vmatprep.subr.mxu0 0.0
  %324 = vmatpush1.msra.mxu0 0.0
  %325 = vmatprep.subr.mxu0 0.0
  %326 = vmatpush1.msra.mxu0 0.0
  %327 = vmatprep.subr.mxu0 0.0
  %328 = vmatpush1.msra.mxu0 0.0
  %329 = vmatprep.mubr.f32.mxu0 0.0
  %330 = vmatmul.mubr.f32.gmra.mrb[0].mxu0 %v254
  %v331 = vpop.f32.mrb[0].mxu0
  %v332 = vadd.f32 %v235, %v331
  %v333 = vpop.f32.mrb[0].mxu0
  %334 = vmatprep.mubr.f32.mxu0 0.0
  %335 = vmatmul.mubr.f32.gmra.mrb[0].mxu0 %v257
  %v336 = vpop.f32.mrb[0].mxu0
  %v337 = vadd.f32 %v240, %v336
  %v338 = vpop.f32.mrb[0].mxu0
  %339 = vmatprep.mubr.f32.mxu0 0.0
  %340 = vmatmul.mubr.f32.gmra.mrb[0].mxu0 %v260
  %v341 = vpop.f32.mrb[0].mxu0
  %v342 = vadd.f32 %v245, %v341
  %v343 = vpop.f32.mrb[0].mxu0
  %344 = vmatprep.mubr.f32.mxu0 0.0
  %345 = vmatmul.mubr.f32.gmra.mrb[0].mxu0 %v263
  %v346 = vpop.f32.mrb[0].mxu0
  %v347 = vadd.f32 %v250, %v346
  %v348 = vpop.f32.mrb[0].mxu0
  %349 = vdwg.mxu0
  %v350 = vmax.f32 %v332, 0.0
  %v351 = vmax.f32 %v337, 0.0
  %v352 = vmax.f32 %v342, 0.0
  %v353 = vmax.f32 %v347, 0.0
  %v354 = vld [vmem:[%s5] sm:$0xff]
  %v355 = vld [vmem:[%s6] sm:$0xff]
  %357 = vset.pattern.permute.xlu0 0
  %358 = vperm.xlu0 %357, %v355
  %v359 = vpop.permute.xlu0 %358
  %v362 = vsel %vm86, %v354, 0
  %364 = vmatprep.subr.mxu0 0.0
  %365 = vmatpush1.msra.mxu0 %v350
  %366 = vmatprep.subr.mxu0 0.0
  %367 = vmatpush1.msra.mxu0 %v351
  %368 = vmatprep.subr.mxu0 0.0
  %369 = vmatpush1.msra.mxu0 %v352
  %370 = vmatprep.subr.mxu0 0.0
  %371 = vmatpush1.msra.mxu0 %v353
  %372 = vmatprep.subr.mxu0 0.0
  %373 = vmatpush1.msra.mxu0 0.0
  %374 = vmatprep.subr.mxu0 0.0
  %375 = vmatpush1.msra.mxu0 0.0
  %376 = vmatprep.subr.mxu0 0.0
  %377 = vmatpush1.msra.mxu0 0.0
  %378 = vmatprep.subr.mxu0 0.0
  %379 = vmatpush1.msra.mxu0 0.0
  %380 = vmatprep.subr.mxu0 0.0
  %381 = vmatpush1.msra.mxu0 0.0
  %382 = vmatprep.subr.mxu0 0.0
  %383 = vmatpush1.msra.mxu0 0.0
  %384 = vmatprep.subr.mxu0 0.0
  %385 = vmatpush1.msra.mxu0 0.0
  %386 = vmatprep.subr.mxu0 0.0
  %387 = vmatpush1.msra.mxu0 0.0
  %388 = vmatprep.subr.mxu0 0.0
  %389 = vmatpush1.msra.mxu0 0.0
  %390 = vmatprep.subr.mxu0 0.0
  %391 = vmatpush1.msra.mxu0 0.0
  %392 = vmatprep.subr.mxu0 0.0
  %393 = vmatpush1.msra.mxu0 0.0
  %394 = vmatprep.subr.mxu0 0.0
  %395 = vmatpush1.msra.mxu0 0.0
  %396 = vmatprep.subr.mxu0 0.0
  %397 = vmatpush1.msra.mxu0 0.0
  %398 = vmatprep.subr.mxu0 0.0
  %399 = vmatpush1.msra.mxu0 0.0
  %400 = vmatprep.subr.mxu0 0.0
  %401 = vmatpush1.msra.mxu0 0.0
  %402 = vmatprep.subr.mxu0 0.0
  %403 = vmatpush1.msra.mxu0 0.0
  %404 = vmatprep.subr.mxu0 0.0
  %405 = vmatpush1.msra.mxu0 0.0
  %406 = vmatprep.subr.mxu0 0.0
  %407 = vmatpush1.msra.mxu0 0.0
  %408 = vmatprep.subr.mxu0 0.0
  %409 = vmatpush1.msra.mxu0 0.0
  %410 = vmatprep.subr.mxu0 0.0
  %411 = vmatpush1.msra.mxu0 0.0
  %412 = vmatprep.subr.mxu0 0.0
  %413 = vmatpush1.msra.mxu0 0.0
  %414 = vmatprep.subr.mxu0 0.0
  %415 = vmatpush1.msra.mxu0 0.0
  %416 = vmatprep.subr.mxu0 0.0
  %417 = vmatpush1.msra.mxu0 0.0
  %418 = vmatprep.subr.mxu0 0.0
  %419 = vmatpush1.msra.mxu0 0.0
  %420 = vmatprep.subr.mxu0 0.0
  %421 = vmatpush1.msra.mxu0 0.0
  %422 = vmatprep.subr.mxu0 0.0
  %423 = vmatpush1.msra.mxu0 0.0
  %424 = vmatprep.subr.mxu0 0.0
  %425 = vmatpush1.msra.mxu0 0.0
  %426 = vmatprep.subr.mxu0 0.0
  %427 = vmatpush1.msra.mxu0 0.0
  %428 = vmatprep.mubr.f32.mxu0 0.0
  %429 = vmatmul.mubr.f32.gmra.mrb[0].mxu0 %v362
  %v430 = vpop.f32.mrb[0].mxu0
  %v431 = vadd.f32 %v359, %v430
  %v432 = vpop.f32.mrb[0].mxu0
  %433 = vdwg.mxu0
  %434 = vst [vmem:[%s7] sm:$0xff] %v431
  // Predicated region
  $region30: #{alpha_mcf_forward.1} parent=0 // pred_check
    _
  $region31: #{alpha_mcf_forward.1} parent=0 // pred_check_branch
    %436 = sbr.rel (0) target = $region33
  $region32: #{alpha_mcf_forward.1} parent=0 // pred_region
    _
  $region33: #{alpha_mcf_forward.1} parent=0 // pred_fallthru
    _
  // Predicated region
  $region34: #{alpha_mcf_forward.1} parent=0 // pred_check
    _
  $region35: #{alpha_mcf_forward.1} parent=0 // pred_check_branch
    %438 = sbr.rel (0) target = $region37
  $region36: #{alpha_mcf_forward.1} parent=0 // pred_region
    _
  $region37: #{alpha_mcf_forward.1} parent=0 // pred_fallthru
    _

</llo_original>
